<compile_context>
chip_gen: v5e
topology: v5e:2x2
jax: 0.10.0
libtpu: 0.0.40
codegen_flags: <defaults>
</compile_context>

<pallas_src>
import functools

import jax
import jax.numpy as jnp
from jax.experimental import pallas as pl
from jax.experimental.pallas import tpu as pltpu


def _blend_kernel(f_ref, w_ref, b_ref, src_ref, ref_ref,
                  img_out_ref, mask_out_ref, *, inv_num_masks):
    # f_ref:        (1, C, TP)   feature-map pixel tile for one batch item
    # w_ref:        (M, C)       stacked 1x1 conv weights (constant across grid)
    # b_ref:        (M, 1)       stacked 1x1 conv biases
    # src_ref:      (1, 3, TP)   source image tile
    # ref_ref:      (1, 3, TP)   reference image tile
    # img_out_ref:  (1, 3, TP)   blended image tile
    # mask_out_ref: (1, 1, TP)   single-channel mask (broadcast to 3ch outside)
    f = f_ref[0].astype(jnp.float32)                    # (C, TP)
    w = w_ref[...].astype(jnp.float32)                  # (M, C)
    b = b_ref[...].astype(jnp.float32)                  # (M, 1)

    # All num_masks 1x1 convs at once on the MXU: (M, C) @ (C, TP) -> (M, TP).
    logits = jnp.dot(w, f, preferred_element_type=jnp.float32) + b
    masks = jax.nn.sigmoid(logits)                      # (M, TP)

    # Mean of sigmoids is already in (0, 1): torch.clip(., 0, 1) is a no-op.
    blended = jnp.sum(masks, axis=0, keepdims=True) * inv_num_masks   # (1, TP)

    src = src_ref[0].astype(jnp.float32)                # (3, TP)
    refi = ref_ref[0].astype(jnp.float32)               # (3, TP)
    # blended*ref + (1-blended)*src  ==  src + blended*(ref - src)
    blended_img = src + blended * (refi - src)          # (3, TP)

    img_out_ref[0] = blended_img.astype(img_out_ref.dtype)
    mask_out_ref[0] = blended.astype(mask_out_ref.dtype)


def _choose_pixel_tile(p, c, num_masks, in_itemsize, out_itemsize,
                       budget_bytes=16 << 20, max_lanes=8192):
    """Largest pixel tile TP that divides P, is a multiple of 128, and keeps the
    double-buffered VMEM footprint under a budget safe for v5e/v6e/v7x."""
    if p % 128 != 0:
        # (8,128) rule satisfied only by taking the full (un-tiled) pixel axis.
        return p
    per_pixel = (2 * (c + 6) * in_itemsize          # 2x-buffered feat + src + ref
                 + 2 * 4 * out_itemsize             # 2x-buffered img(3) + mask(1)
                 + (num_masks + c + 16) * 4)        # f32 intermediates headroom
    cap_lanes = max(128, min(max_lanes, budget_bytes // per_pixel))
    cap_blocks = max(1, cap_lanes // 128)
    n_blocks = p // 128
    k = 1
    for d in range(1, n_blocks + 1):                # largest divisor <= cap
        if n_blocks % d == 0 and d <= cap_blocks:
            k = d
    return 128 * k


def blend_generator_forward(feature_map, source_img, reference_img,
                            weights, biases, *, max_pixel_tile=8192):
    """feature_map: (N, C, H, W); source/reference: (N, 3, H, W).

    weights: (num_masks, C), biases: (num_masks,).
    Returns (blended_image, blended_mask), both (N, 3, H, W).
    """
    n, c, h, w = feature_map.shape
    assert source_img.shape[2:] == (h, w), (
        "TODO(synk): bilinear resize path not implemented; spatial dims must match")
    assert reference_img.shape == source_img.shape
    num_masks = weights.shape[0]
    p = h * w

    # Keep native dtypes — no wrapper-side upcast (would add a full HBM pass).
    f = feature_map.reshape(n, c, p)
    src = source_img.reshape(n, 3, p)
    ref = reference_img.reshape(n, 3, p)
    wgt = weights                                       # (M, C)
    bia = biases.reshape(num_masks, 1)                  # (M, 1)

    out_dtype = (source_img.dtype
                 if jnp.issubdtype(source_img.dtype, jnp.floating)
                 else jnp.float32)

    f_isz = jnp.dtype(feature_map.dtype).itemsize
    img_isz = jnp.dtype(source_img.dtype).itemsize
    out_isz = jnp.dtype(out_dtype).itemsize
    in_isz = max(f_isz, img_isz)

    tp = _choose_pixel_tile(p, c, num_masks, in_isz, out_isz,
                            max_lanes=max_pixel_tile)
    assert p % tp == 0
    n_ptiles = p // tp

    kernel = functools.partial(_blend_kernel,
                               inv_num_masks=float(1.0 / num_masks))

    cost = pl.CostEstimate(
        flops=int(2 * n * num_masks * c * p + 6 * n * p),
        transcendentals=int(n * num_masks * p),
        bytes_accessed=int(n * p * (c * f_isz + 6 * img_isz + 4 * out_isz)
                           + wgt.size * jnp.dtype(wgt.dtype).itemsize
                           + bia.size * jnp.dtype(bia.dtype).itemsize),
    )

    img_out, mask_out = pl.pallas_call(
        kernel,
        out_shape=(jax.ShapeDtypeStruct((n, 3, p), out_dtype),
                   jax.ShapeDtypeStruct((n, 1, p), out_dtype)),
        grid_spec=pltpu.PrefetchScalarGridSpec(
            num_scalar_prefetch=0,
            grid=(n, n_ptiles),
            in_specs=[
                pl.BlockSpec((1, c, tp), lambda i, j: (i, 0, j)),        # feature
                pl.BlockSpec((num_masks, c), lambda i, j: (0, 0)),       # weights
                pl.BlockSpec((num_masks, 1), lambda i, j: (0, 0)),       # biases
                pl.BlockSpec((1, 3, tp), lambda i, j: (i, 0, j)),        # source
                pl.BlockSpec((1, 3, tp), lambda i, j: (i, 0, j)),        # reference
            ],
            out_specs=[
                pl.BlockSpec((1, 3, tp), lambda i, j: (i, 0, j)),        # image
                pl.BlockSpec((1, 1, tp), lambda i, j: (i, 0, j)),        # mask (1ch)
            ],
        ),
        compiler_params=pltpu.CompilerParams(
            dimension_semantics=("parallel", "parallel")),
        cost_estimate=cost,
    )(f, wgt, bia, src, ref)

    blended_image = img_out.reshape(n, 3, h, w)
    # repeat(1,3,1,1): broadcast the single-channel mask outside the kernel.
    blended_mask = jnp.broadcast_to(mask_out.reshape(n, 1, h, w), (n, 3, h, w))
    return blended_image, blended_mask


def _reference_jax(feature_map, source_img, reference_img, weights, biases):
    # Pure-JAX reference of the PyTorch forward (1x1 convs == per-pixel matmul).
    n, c, h, w = feature_map.shape
    f = feature_map.reshape(n, c, h * w).astype(jnp.float32)
    logits = jnp.einsum('mc,ncp->nmp', weights, f) + biases[None, :, None]
    masks = jax.nn.sigmoid(logits)                       # (N, M, P)
    blended = jnp.clip(jnp.mean(masks, axis=1, keepdims=True), 0.0, 1.0)
    mask3 = jnp.broadcast_to(blended, (n, 3, h * w)).reshape(n, 3, h, w)
    img = mask3 * reference_img + (1.0 - mask3) * source_img
    return img, mask3


if __name__ == "__main__":
    # Small shapes consistent with the module's forward:
    N, C, H, W = 2, 32, 16, 16
    NUM_MASKS = 8

    key = jax.random.PRNGKey(0)
    k_f, k_s, k_r, k_w, k_b = jax.random.split(key, 5)

    feature_map = jax.random.normal(k_f, (N, C, H, W), dtype=jnp.float32)
    source_img = jax.random.uniform(k_s, (N, 3, H, W), dtype=jnp.float32)
    reference_img = jax.random.uniform(k_r, (N, 3, H, W), dtype=jnp.float32)

    # Deterministic 1x1-conv parameters (PyTorch: Conv2d(C, 1, k=1) per mask).
    # Uniform(-1/sqrt(C), 1/sqrt(C)) mimics the default fan-in init scale.
    bound = 1.0 / jnp.sqrt(jnp.float32(C))
    weights = jax.random.uniform(k_w, (NUM_MASKS, C), dtype=jnp.float32,
                                 minval=-bound, maxval=bound)
    biases = jax.random.uniform(k_b, (NUM_MASKS,), dtype=jnp.float32,
                                minval=-bound, maxval=bound)

    # max_pixel_tile=128 forces multiple pixel tiles (H*W=256 -> 2 tiles) so
    # the tiled grid path is exercised at this small test size.
    blended_image, blended_mask = blend_generator_forward(
        feature_map, source_img, reference_img, weights, biases,
        max_pixel_tile=128)
    jax.block_until_ready((blended_image, blended_mask))

    ref_img, ref_mask = _reference_jax(
        feature_map, source_img, reference_img, weights, biases)

    assert blended_image.shape == (N, 3, H, W)
    assert blended_mask.shape == (N, 3, H, W)
    assert jnp.allclose(blended_image, ref_img, atol=1e-5, rtol=1e-5)
    assert jnp.allclose(blended_mask, ref_mask, atol=1e-5, rtol=1e-5)

    print("KERNEL_OK")
</pallas_src>

<mosaic_0001>
module attributes {stable_mosaic.version = 11 : i64} {
  func.func @_blend_kernel(%arg0: i32, %arg1: i32, %arg2: memref<1x32x128xf32, #tpu.memory_space<vmem>>, %arg3: memref<8x32xf32, #tpu.memory_space<vmem>>, %arg4: memref<8x1xf32, #tpu.memory_space<vmem>>, %arg5: memref<1x3x128xf32, #tpu.memory_space<vmem>>, %arg6: memref<1x3x128xf32, #tpu.memory_space<vmem>>, %arg7: memref<1x3x128xf32, #tpu.memory_space<vmem>>, %arg8: memref<1x1x128xf32, #tpu.memory_space<vmem>>) attributes {dimension_semantics = [#tpu.dimension_semantics<parallel>, #tpu.dimension_semantics<parallel>], iteration_bounds = array<i64: 2, 2>, scalar_prefetch = 0 : i64, scratch_operands = 0 : i64, tpu.core_type = #tpu.core_type<tc>, window_params = [{transform_indices = @transform_0, window_bounds = array<i64: 1, 32, 128>}, {pipeline_mode = #tpu.pipeline_mode<synchronous>, transform_indices = @transform_1, window_bounds = array<i64: 8, 32>}, {pipeline_mode = #tpu.pipeline_mode<synchronous>, transform_indices = @transform_2, window_bounds = array<i64: 8, 1>}, {transform_indices = @transform_3, window_bounds = array<i64: 1, 3, 128>}, {transform_indices = @transform_4, window_bounds = array<i64: 1, 3, 128>}, {transform_indices = @transform_5, window_bounds = array<i64: 1, 3, 128>}, {transform_indices = @transform_6, window_bounds = array<i64: 1, 1, 128>}]} {
    %c0 = arith.constant 0 : index
    %c0_0 = arith.constant 0 : index
    %c0_1 = arith.constant 0 : index
    %0 = vector.load %arg2[%c0, %c0_0, %c0_1] : memref<1x32x128xf32, #tpu.memory_space<vmem>>, vector<1x32x128xf32>
    %1 = vector.shape_cast %0 : vector<1x32x128xf32> to vector<32x128xf32>
    %c0_2 = arith.constant 0 : index
    %c0_3 = arith.constant 0 : index
    %2 = vector.load %arg3[%c0_2, %c0_3] : memref<8x32xf32, #tpu.memory_space<vmem>>, vector<8x32xf32>
    %c0_4 = arith.constant 0 : index
    %c0_5 = arith.constant 0 : index
    %3 = vector.load %arg4[%c0_4, %c0_5] : memref<8x1xf32, #tpu.memory_space<vmem>>, vector<8x1xf32>
    %cst = arith.constant dense<0.000000e+00> : vector<8x128xf32>
    %4 = tpu.matmul %2, %1, %cst {dimension_numbers = #tpu.dot_dimension_numbers<[1], [0], [0], [1], [0, 0, 1, 1], [], []>} : vector<8x32xf32>, vector<32x128xf32>, vector<8x128xf32> -> vector<8x128xf32>
    %5 = vector.broadcast %3 : vector<8x1xf32> to vector<8x128xf32>
    %6 = arith.addf %4, %5 : vector<8x128xf32>
    %7 = arith.negf %6 : vector<8x128xf32>
    %8 = math.exp %7 : vector<8x128xf32>
    %cst_6 = arith.constant 1.000000e+00 : f32
    %9 = vector.broadcast %cst_6 : f32 to vector<8x128xf32>
    %10 = arith.addf %9, %8 : vector<8x128xf32>
    %11 = arith.divf %9, %10 : vector<8x128xf32>
    %cst_7 = arith.constant dense<0.000000e+00> : vector<128xf32>
    %12 = vector.multi_reduction <add>, %11, %cst_7 [0] : vector<8x128xf32> to vector<128xf32>
    %13 = vector.shape_cast %12 : vector<128xf32> to vector<1x128xf32>
    %cst_8 = arith.constant 1.250000e-01 : f32
    %14 = vector.broadcast %cst_8 : f32 to vector<1x128xf32>
    %15 = arith.mulf %13, %14 : vector<1x128xf32>
    %c0_9 = arith.constant 0 : index
    %c0_10 = arith.constant 0 : index
    %c0_11 = arith.constant 0 : index
    %16 = vector.load %arg5[%c0_9, %c0_10, %c0_11] : memref<1x3x128xf32, #tpu.memory_space<vmem>>, vector<1x3x128xf32>
    %17 = vector.shape_cast %16 : vector<1x3x128xf32> to vector<3x128xf32>
    %c0_12 = arith.constant 0 : index
    %c0_13 = arith.constant 0 : index
    %c0_14 = arith.constant 0 : index
    %18 = vector.load %arg6[%c0_12, %c0_13, %c0_14] : memref<1x3x128xf32, #tpu.memory_space<vmem>>, vector<1x3x128xf32>
    %19 = vector.shape_cast %18 : vector<1x3x128xf32> to vector<3x128xf32>
    %20 = arith.subf %19, %17 : vector<3x128xf32>
    %21 = vector.broadcast %15 : vector<1x128xf32> to vector<3x128xf32>
    %22 = arith.mulf %21, %20 : vector<3x128xf32>
    %23 = arith.addf %17, %22 : vector<3x128xf32>
    %c0_15 = arith.constant 0 : index
    %c0_16 = arith.constant 0 : index
    %c0_17 = arith.constant 0 : index
    %24 = vector.load %arg7[%c0_15, %c0_16, %c0_17] : memref<1x3x128xf32, #tpu.memory_space<vmem>>, vector<1x3x128xf32>
    %25 = vector.shape_cast %24 : vector<1x3x128xf32> to vector<3x128xf32>
    %26 = vector.shape_cast %23 : vector<3x128xf32> to vector<1x3x128xf32>
    tpu.vector_store %arg7[%c0_15, %c0_16, %c0_17], %26 {strides = array<i32>} : memref<1x3x128xf32, #tpu.memory_space<vmem>>, vector<1x3x128xf32>,
    %c0_18 = arith.constant 0 : index
    %c0_19 = arith.constant 0 : index
    %c0_20 = arith.constant 0 : index
    %27 = vector.load %arg8[%c0_18, %c0_19, %c0_20] : memref<1x1x128xf32, #tpu.memory_space<vmem>>, vector<1x1x128xf32>
    %28 = vector.shape_cast %27 : vector<1x1x128xf32> to vector<1x128xf32>
    %29 = vector.shape_cast %15 : vector<1x128xf32> to vector<1x1x128xf32>
    tpu.vector_store %arg8[%c0_18, %c0_19, %c0_20], %29 {strides = array<i32>} : memref<1x1x128xf32, #tpu.memory_space<vmem>>, vector<1x1x128xf32>,
    return
  }
  func.func @transform_0(%arg0: i32, %arg1: i32) -> (i32, i32, i32) {
    %c0_i32 = arith.constant 0 : i32
    %c0_i32_0 = arith.constant 0 : i32
    return %arg0, %c0_i32, %arg1 : i32, i32, i32
  }
  func.func @transform_1(%arg0: i32, %arg1: i32) -> (i32, i32) {
    %c0_i32 = arith.constant 0 : i32
    %c0_i32_0 = arith.constant 0 : i32
    %c0_i32_1 = arith.constant 0 : i32
    return %c0_i32, %c0_i32_0 : i32, i32
  }
  func.func @transform_2(%arg0: i32, %arg1: i32) -> (i32, i32) {
    %c0_i32 = arith.constant 0 : i32
    %c0_i32_0 = arith.constant 0 : i32
    %c0_i32_1 = arith.constant 0 : i32
    return %c0_i32, %c0_i32_0 : i32, i32
  }
  func.func @transform_3(%arg0: i32, %arg1: i32) -> (i32, i32, i32) {
    %c0_i32 = arith.constant 0 : i32
    %c0_i32_0 = arith.constant 0 : i32
    return %arg0, %c0_i32, %arg1 : i32, i32, i32
  }
  func.func @transform_4(%arg0: i32, %arg1: i32) -> (i32, i32, i32) {
    %c0_i32 = arith.constant 0 : i32
    %c0_i32_0 = arith.constant 0 : i32
    return %arg0, %c0_i32, %arg1 : i32, i32, i32
  }
  func.func @transform_5(%arg0: i32, %arg1: i32) -> (i32, i32, i32) {
    %c0_i32 = arith.constant 0 : i32
    %c0_i32_0 = arith.constant 0 : i32
    return %arg0, %c0_i32, %arg1 : i32, i32, i32
  }
  func.func @transform_6(%arg0: i32, %arg1: i32) -> (i32, i32, i32) {
    %c0_i32 = arith.constant 0 : i32
    %c0_i32_0 = arith.constant 0 : i32
    return %arg0, %c0_i32, %arg1 : i32, i32, i32
  }
}

</mosaic_0001>

<llo_original>
// kernel: tpu_custom_call.1
$region0: #{tpu_custom_call.1}
  #allocation0 [shape = 'u32[]', space=smem, size = 0x4, offset = 0x4, fixed_abs, tag = 'smem constant byte address 0x4 - core index']
  #allocation1 [shape = 'u32[72,128]{1,0:T(1,128)}', space=vmem, size = 0x9000, scoped, tag = 'internal scratch']
  %s0 = inlined_call_operand.hbm [shape: f32[2,32,256], index: 0, kind: input, shape index: {}]
  %s1 = inlined_call_operand.vmem [shape: f32[8,32], index: 1, kind: input, shape index: {}]
  %s2 = inlined_call_operand.vmem [shape: f32[8,1], index: 2, kind: input, shape index: {}]
  %s3 = inlined_call_operand.vmem [shape: f32[2,3,256], index: 3, kind: input, shape index: {}]
  %s4 = inlined_call_operand.vmem [shape: f32[2,3,256], index: 4, kind: input, shape index: {}]
  %s5 = inlined_call_operand.vmem [shape: f32[2,3,256], index: 5, kind: output, shape index: {0}]
  %s6 = inlined_call_operand.hbm [shape: f32[2,1,256], index: 6, kind: output, shape index: {1}]
  %7 = xla_tuple %s5, %s6
  %s8 = sld [smem:[#allocation0]]
  $region65: #{tpu_custom_call.1} parent=0
    _
  %s10 = ssub.s32 1, %s8
  %s11 = scalar_select 0, %s10, %s8
  $region1: #{tpu_custom_call.1} parent=0
    #allocation2 [shape = 'u8[32768]{0}', space=vmem, size = 0x8000, scoped, tag = 'input window, operand 0']
    #allocation3 [shape = 's32[2]{0}', space=sflag, size = 0x8, scoped, tag = 'scoped memory for tpu_custom_call.1']
    #allocation4 [shape = 's32[2]{0}', space=sflag, size = 0x8, scoped, tag = 'scoped memory for tpu_custom_call.1']
    #allocation5 [shape = 'u8[1024]{0}', space=vmem, size = 0x400, scoped, tag = 'output window, operand 1']
    %12 = vsyncpa [#allocation3], 0
    %s13 = scalar_lea.sflag [#allocation3], 1
    %14 = vsyncpa %s13, 0
    %15 = vsyncpa [#allocation4], 0
    %s16 = scalar_lea.sflag [#allocation4], 1
    %17 = vsyncpa %s16, 0
    loop: start=0, step=1, limit=6
    $region2: #{tpu_custom_call.1} parent=1 // loop_pre_header
      _
    $region3: #{tpu_custom_call.1} parent=1 // loop_header
      %s19 = sphi 0, %s23
      %p20 = scmp.ge.s32.totalorder %s19, 6
      %s26 = sphi 0, %s38
      %s27 = sphi 0, %s34
      %s28 = sphi 0, %s26
      %s29 = sphi 0, %s27
      %s30 = sphi 0, %s28
      %s31 = sphi 0, %s29
      %s43 = sphi 0, %s45
      %s46 = sphi 0, %s43
      %s47 = sphi 0, %s46
      %s63 = sphi 0, %s47
      %s67 = sphi 0, %s67
      %s69 = sphi 0, %s67
      %s70 = sphi 0, %s69
      %s84 = sphi 0, %s70
      %s88 = sphi 0, %s88
      %s90 = sphi 0, %s88
      %s91 = sphi 0, %s90
      %s105 = sphi 0, %s91
      %s113 = sphi 0, %s115
      %s116 = sphi 0, %s113
      %s117 = sphi 0, %s116
      %s133 = sphi 0, %s117
      %s141 = sphi 0, %s143
      %s144 = sphi 0, %s141
      %s145 = sphi 0, %s144
      %s161 = sphi 0, %s145
      %s169 = sphi 0, %s171
      %s172 = sphi 0, %s169
      %s173 = sphi 0, %s172
      %s189 = sphi 0, %s173
      %s197 = sphi 0, %s199
      %s200 = sphi 0, %s197
      %s201 = sphi 0, %s200
      %s217 = sphi 0, %s201
    $region4: #{tpu_custom_call.1} parent=1 // loop_header_branch
      %22 = sbr.rel (%p20) target = $region8
    $region5: #{tpu_custom_call.1} parent=1 // loop_body
      %s24 = ssub.s32 %s19, 1
      %s25 = ssub.s32 %s19, 2
      %s32 = sadd.s32 1, %s27
      %p33 = scmp.ge.s32.totalorder %s32, 2
      %s34 = scalar_select %p33, 0, %s32
      %s35 = sadd.s32 1, %s26
      %s36 = scalar_select %p33, %s35, %s26
      %p37 = scmp.ge.s32.totalorder %s36, 2
      %s38 = scalar_select %p37, 0, %s36
      %s39 = ssub.s32 %s26, %s38
      %s40 = ssub.s32 %s27, %s34
      %s41 = sor.u32 %s39, %s40
      %p42 = scmp.eq.s32.totalorder %s41, 0
      %s44 = sadd.s32 %s43, 1
      %s45 = scalar_select %p42, %s43, %s44
      %p48 = pneg %p42
      %p49 = scmp.eq.s32.totalorder %s19, 3
      %p50 = por %p48, %p49
      %p51 = scmp.ne.s32.totalorder %s43, %s46
      %p52 = scmp.eq.s32.totalorder %s19, 0
      %p53 = por %p51, %p52
      %p54 = scmp.ne.s32.totalorder %s43, %s46
      %p55 = scmp.eq.s32.totalorder %s24, 3
      %p56 = por %p54, %p55
      %p57 = scmp.ne.s32.totalorder %s46, %s47
      %p58 = scmp.eq.s32.totalorder %s24, 0
      %p59 = por %p57, %p58
      %p60 = scmp.ne.s32.totalorder %s46, %s47
      %p61 = scmp.eq.s32.totalorder %s25, 3
      %p62 = por %p60, %p61
      %p64 = scmp.ne.s32.totalorder %s47, %s63
      %p65 = scmp.eq.s32.totalorder %s25, 0
      %p66 = por %p64, %p65
      %s68 = sadd.s32 %s67, 1
      %p71 = scmp.eq.s32.totalorder %s19, 3
      %p72 = scmp.ne.s32.totalorder %s67, %s69
      %p73 = scmp.eq.s32.totalorder %s19, 0
      %p74 = por %p72, %p73
      %p75 = scmp.ne.s32.totalorder %s67, %s69
      %p76 = scmp.eq.s32.totalorder %s24, 3
      %p77 = por %p75, %p76
      %p78 = scmp.ne.s32.totalorder %s69, %s70
      %p79 = scmp.eq.s32.totalorder %s24, 0
      %p80 = por %p78, %p79
      %p81 = scmp.ne.s32.totalorder %s69, %s70
      %p82 = scmp.eq.s32.totalorder %s25, 3
      %p83 = por %p81, %p82
      %p85 = scmp.ne.s32.totalorder %s70, %s84
      %p86 = scmp.eq.s32.totalorder %s25, 0
      %p87 = por %p85, %p86
      %s89 = sadd.s32 %s88, 1
      %p92 = scmp.eq.s32.totalorder %s19, 3
      %p93 = scmp.ne.s32.totalorder %s88, %s90
      %p94 = scmp.eq.s32.totalorder %s19, 0
      %p95 = por %p93, %p94
      %p96 = scmp.ne.s32.totalorder %s88, %s90
      %p97 = scmp.eq.s32.totalorder %s24, 3
      %p98 = por %p96, %p97
      %p99 = scmp.ne.s32.totalorder %s90, %s91
      %p100 = scmp.eq.s32.totalorder %s24, 0
      %p101 = por %p99, %p100
      %p102 = scmp.ne.s32.totalorder %s90, %s91
      %p103 = scmp.eq.s32.totalorder %s25, 3
      %p104 = por %p102, %p103
      %p106 = scmp.ne.s32.totalorder %s91, %s105
      %p107 = scmp.eq.s32.totalorder %s25, 0
      %p108 = por %p106, %p107
      %s109 = ssub.s32 %s26, %s38
      %s110 = ssub.s32 %s27, %s34
      %s111 = sor.u32 %s109, %s110
      %p112 = scmp.eq.s32.totalorder %s111, 0
      %s114 = sadd.s32 %s113, 1
      %s115 = scalar_select %p112, %s113, %s114
      %p118 = pneg %p112
      %p119 = scmp.eq.s32.totalorder %s19, 3
      %p120 = por %p118, %p119
      %p121 = scmp.ne.s32.totalorder %s113, %s116
      %p122 = scmp.eq.s32.totalorder %s19, 0
      %p123 = por %p121, %p122
      %p124 = scmp.ne.s32.totalorder %s113, %s116
      %p125 = scmp.eq.s32.totalorder %s24, 3
      %p126 = por %p124, %p125
      %p127 = scmp.ne.s32.totalorder %s116, %s117
      %p128 = scmp.eq.s32.totalorder %s24, 0
      %p129 = por %p127, %p128
      %p130 = scmp.ne.s32.totalorder %s116, %s117
      %p131 = scmp.eq.s32.totalorder %s25, 3
      %p132 = por %p130, %p131
      %p134 = scmp.ne.s32.totalorder %s117, %s133
      %p135 = scmp.eq.s32.totalorder %s25, 0
      %p136 = por %p134, %p135
      %s137 = ssub.s32 %s26, %s38
      %s138 = ssub.s32 %s27, %s34
      %s139 = sor.u32 %s137, %s138
      %p140 = scmp.eq.s32.totalorder %s139, 0
      %s142 = sadd.s32 %s141, 1
      %s143 = scalar_select %p140, %s141, %s142
      %p146 = pneg %p140
      %p147 = scmp.eq.s32.totalorder %s19, 3
      %p148 = por %p146, %p147
      %p149 = scmp.ne.s32.totalorder %s141, %s144
      %p150 = scmp.eq.s32.totalorder %s19, 0
      %p151 = por %p149, %p150
      %p152 = scmp.ne.s32.totalorder %s141, %s144
      %p153 = scmp.eq.s32.totalorder %s24, 3
      %p154 = por %p152, %p153
      %p155 = scmp.ne.s32.totalorder %s144, %s145
      %p156 = scmp.eq.s32.totalorder %s24, 0
      %p157 = por %p155, %p156
      %p158 = scmp.ne.s32.totalorder %s144, %s145
      %p159 = scmp.eq.s32.totalorder %s25, 3
      %p160 = por %p158, %p159
      %p162 = scmp.ne.s32.totalorder %s145, %s161
      %p163 = scmp.eq.s32.totalorder %s25, 0
      %p164 = por %p162, %p163
      %s165 = ssub.s32 %s26, %s38
      %s166 = ssub.s32 %s27, %s34
      %s167 = sor.u32 %s165, %s166
      %p168 = scmp.eq.s32.totalorder %s167, 0
      %s170 = sadd.s32 %s169, 1
      %s171 = scalar_select %p168, %s169, %s170
      %p174 = pneg %p168
      %p175 = scmp.eq.s32.totalorder %s19, 3
      %p176 = por %p174, %p175
      %p177 = scmp.ne.s32.totalorder %s169, %s172
      %p178 = scmp.eq.s32.totalorder %s19, 0
      %p179 = por %p177, %p178
      %p180 = scmp.ne.s32.totalorder %s169, %s172
      %p181 = scmp.eq.s32.totalorder %s24, 3
      %p182 = por %p180, %p181
      %p183 = scmp.ne.s32.totalorder %s172, %s173
      %p184 = scmp.eq.s32.totalorder %s24, 0
      %p185 = por %p183, %p184
      %p186 = scmp.ne.s32.totalorder %s172, %s173
      %p187 = scmp.eq.s32.totalorder %s25, 3
      %p188 = por %p186, %p187
      %p190 = scmp.ne.s32.totalorder %s173, %s189
      %p191 = scmp.eq.s32.totalorder %s25, 0
      %p192 = por %p190, %p191
      %s193 = ssub.s32 %s26, %s38
      %s194 = ssub.s32 %s27, %s34
      %s195 = sor.u32 %s193, %s194
      %p196 = scmp.eq.s32.totalorder %s195, 0
      %s198 = sadd.s32 %s197, 1
      %s199 = scalar_select %p196, %s197, %s198
      %p202 = pneg %p196
      %p203 = scmp.eq.s32.totalorder %s19, 3
      %p204 = por %p202, %p203
      %p205 = scmp.ne.s32.totalorder %s197, %s200
      %p206 = scmp.eq.s32.totalorder %s19, 0
      %p207 = por %p205, %p206
      %p208 = scmp.ne.s32.totalorder %s197, %s200
      %p209 = scmp.eq.s32.totalorder %s24, 3
      %p210 = por %p208, %p209
      %p211 = scmp.ne.s32.totalorder %s200, %s201
      %p212 = scmp.eq.s32.totalorder %s24, 0
      %p213 = por %p211, %p212
      %p214 = scmp.ne.s32.totalorder %s200, %s201
      %p215 = scmp.eq.s32.totalorder %s25, 3
      %p216 = por %p214, %p215
      %p218 = scmp.ne.s32.totalorder %s201, %s217
      %p219 = scmp.eq.s32.totalorder %s25, 0
      %p220 = por %p218, %p219
      %p221 = scmp.le.s32.totalorder 1, %s19
      %p222 = scmp.lt.s32.totalorder %s19, 5
      %p223 = pnand %p221, %p222
      %p224 = pneg %p223
      // Predicated region
      $region9: #{tpu_custom_call.1} parent=5 // pred_check
        _
      $region10: #{tpu_custom_call.1} parent=5 // pred_check_branch
        %226 = sbr.rel (%p223) target = $region12
      $region11: #{tpu_custom_call.1} parent=5 // pred_region
        %s227 = ssub.s32 %s19, 1
        // Predicated region
        $region13: #{tpu_custom_call.1} parent=11 // pred_check
          %p228 = pneg %p80
        $region14: #{tpu_custom_call.1} parent=11 // pred_check_branch
          %230 = sbr.rel (%p228) target = $region16
        $region15: #{tpu_custom_call.1} parent=11 // pred_region
          _
        $region16: #{tpu_custom_call.1} parent=11 // pred_fallthru
          _
        // Predicated region
        $region17: #{tpu_custom_call.1} parent=11 // pred_check
          %p231 = pneg %p101
        $region18: #{tpu_custom_call.1} parent=11 // pred_check_branch
          %233 = sbr.rel (%p231) target = $region20
        $region19: #{tpu_custom_call.1} parent=11 // pred_region
          _
        $region20: #{tpu_custom_call.1} parent=11 // pred_fallthru
          _
      $region12: #{tpu_custom_call.1} parent=5 // pred_fallthru
        _
      %p234 = scmp.lt.s32.totalorder %s19, 4
      // Predicated region
      $region21: #{tpu_custom_call.1} parent=5 // pred_check
        %p235 = pneg %p234
      $region22: #{tpu_custom_call.1} parent=5 // pred_check_branch
        %237 = sbr.rel (%p235) target = $region24
      $region23: #{tpu_custom_call.1} parent=5 // pred_region
        // Predicated region
        $region25: #{tpu_custom_call.1} parent=23 // pred_check
          %p238 = pneg %p53
        $region26: #{tpu_custom_call.1} parent=23 // pred_check_branch
          %240 = sbr.rel (%p238) target = $region28
        $region27: #{tpu_custom_call.1} parent=23 // pred_region
          %s241 = sand.u32 %s43, 1
          %s242 = scalar_lea.sflag [#allocation3], %s241
          %s243 = sand.u32 %s43, 1
          %s244 = smul.addr %s243, 32
          %s245 = scalar_lea.vmem [#allocation2], %s244
          %247 = vsyncadd %s242, 0
          %s248 = smul.addr %s26, 8
          %s249 = sadd.s32 %s27, %s248
          %s250 = smul.addr %s249, 8
          %s251 = scalar_lea.hbm %s0, %s250
          %s252 = sshll.u32 %s251, 4
          %s253 = int_to_ptr.hbm [resolvable:$true] %s252
          %s254 = sshll.u32 %s245, 4
          %s255 = int_to_ptr.vmem [resolvable:$true] %s254
          %260 = dma.hbm_to_vmem [thread:$0]  %s253, 512, %s255, %s242, 256, 128, 8
        $region28: #{tpu_custom_call.1} parent=23 // pred_fallthru
          _
        // Predicated region
        $region29: #{tpu_custom_call.1} parent=23 // pred_check
          %p261 = pneg %p123
        $region30: #{tpu_custom_call.1} parent=23 // pred_check_branch
          %263 = sbr.rel (%p261) target = $region32
        $region31: #{tpu_custom_call.1} parent=23 // pred_region
          %p264 = scmp.lt.s32.totalorder %s26, 1
          %s265 = scalar_select %p264, %s26, 1
          %p266 = scmp.lt.s32.totalorder %s27, 1
          %s267 = scalar_select %p266, %s27, 1
          %s268 = smul.addr %s265, 2
          %s269 = sadd.s32 %s267, %s268
          %s270 = smul.addr %s269, 4
          %s271 = scalar_lea.vmem %s3, %s270
        $region32: #{tpu_custom_call.1} parent=23 // pred_fallthru
          _
        // Predicated region
        $region33: #{tpu_custom_call.1} parent=23 // pred_check
          %p272 = pneg %p151
        $region34: #{tpu_custom_call.1} parent=23 // pred_check_branch
          %274 = sbr.rel (%p272) target = $region36
        $region35: #{tpu_custom_call.1} parent=23 // pred_region
          %p275 = scmp.lt.s32.totalorder %s26, 1
          %s276 = scalar_select %p275, %s26, 1
          %p277 = scmp.lt.s32.totalorder %s27, 1
          %s278 = scalar_select %p277, %s27, 1
          %s279 = smul.addr %s276, 2
          %s280 = sadd.s32 %s278, %s279
          %s281 = smul.addr %s280, 4
          %s282 = scalar_lea.vmem %s4, %s281
        $region36: #{tpu_custom_call.1} parent=23 // pred_fallthru
          _
      $region24: #{tpu_custom_call.1} parent=5 // pred_fallthru
        _
      %p283 = scmp.le.s32.totalorder 1, %s19
      %p284 = scmp.lt.s32.totalorder %s19, 5
      %p285 = pnand %p283, %p284
      %p286 = pneg %p285
      // Predicated region
      $region37: #{tpu_custom_call.1} parent=5 // pred_check
        _
      $region38: #{tpu_custom_call.1} parent=5 // pred_check_branch
        %288 = sbr.rel (%p285) target = $region40
      $region39: #{tpu_custom_call.1} parent=5 // pred_region
        %s289 = ssub.s32 %s19, 1
        %s290 = sand.u32 %s46, 1
        %s291 = scalar_lea.sflag [#allocation3], %s290
        %s292 = sand.u32 %s46, 1
        %s293 = smul.addr %s292, 32
        %s294 = scalar_lea.vmem [#allocation2], %s293
        // Predicated region
        $region41: #{tpu_custom_call.1} parent=39 // pred_check
          %p295 = pneg %p59
        $region42: #{tpu_custom_call.1} parent=39 // pred_check_branch
          %297 = sbr.rel (%p295) target = $region44
        $region43: #{tpu_custom_call.1} parent=39 // pred_region
          %299 = dma.done %s291, 512
        $region44: #{tpu_custom_call.1} parent=39 // pred_fallthru
          _
        %s300 = sand.u32 %s46, 1
        %s301 = scalar_lea.sflag [#allocation3], %s300
        %s302 = sand.u32 %s46, 1
        %s303 = smul.addr %s302, 32
        %s304 = scalar_lea.vmem [#allocation2], %s303
        %p305 = pneg %p59
        %p306 = pneg %p56
        %p307 = pneg %p80
        %p308 = pneg %p77
        %p309 = pneg %p101
        %p310 = pneg %p98
        %p311 = scmp.lt.s32.totalorder %s28, 1
        %s312 = scalar_select %p311, %s28, 1
        %p313 = scmp.lt.s32.totalorder %s29, 1
        %s314 = scalar_select %p313, %s29, 1
        %s315 = smul.addr %s312, 2
        %s316 = sadd.s32 %s314, %s315
        %s317 = smul.addr %s316, 4
        %s318 = scalar_lea.vmem %s3, %s317
        %p319 = pneg %p129
        %p320 = pneg %p126
        %p321 = scmp.lt.s32.totalorder %s28, 1
        %s322 = scalar_select %p321, %s28, 1
        %p323 = scmp.lt.s32.totalorder %s29, 1
        %s324 = scalar_select %p323, %s29, 1
        %s325 = smul.addr %s322, 2
        %s326 = sadd.s32 %s324, %s325
        %s327 = smul.addr %s326, 4
        %s328 = scalar_lea.vmem %s4, %s327
        %p329 = pneg %p157
        %p330 = pneg %p154
        %p331 = pneg %p185
        %p332 = pneg %p182
        %p333 = scmp.lt.s32.totalorder %s28, 1
        %s334 = scalar_select %p333, %s28, 1
        %p335 = scmp.lt.s32.totalorder %s29, 1
        %s336 = scalar_select %p335, %s29, 1
        %s337 = smul.addr %s334, 2
        %s338 = sadd.s32 %s336, %s337
        %s339 = smul.addr %s338, 4
        %s340 = scalar_lea.vmem %s5, %s339
        %p341 = pneg %p213
        %p342 = pneg %p210
        %s343 = sand.u32 %s200, 1
        %s344 = scalar_lea.sflag [#allocation4], %s343
        %s345 = sand.u32 %s200, 1
        %s346 = scalar_lea.vmem [#allocation5], %s345
        %p347 = scmp.lt.s32.totalorder %s28, 1
        %s348 = scalar_select %p347, %s28, 1
        %p349 = scmp.lt.s32.totalorder %s29, 1
        %s350 = scalar_select %p349, %s29, 1
        %s351 = smul.addr %s348, 2
        %s352 = sadd.s32 %s350, %s351
        %s353 = smul.addr %s352, 4
        %s354 = scalar_lea.vmem %s3, %s353
        %p355 = scmp.lt.s32.totalorder %s28, 1
        %s356 = scalar_select %p355, %s28, 1
        %p357 = scmp.lt.s32.totalorder %s29, 1
        %s358 = scalar_select %p357, %s29, 1
        %s359 = smul.addr %s356, 2
        %s360 = sadd.s32 %s358, %s359
        %s361 = smul.addr %s360, 4
        %s362 = scalar_lea.vmem %s4, %s361
        %p363 = scmp.lt.s32.totalorder %s28, 1
        %s364 = scalar_select %p363, %s28, 1
        %p365 = scmp.lt.s32.totalorder %s29, 1
        %s366 = scalar_select %p365, %s29, 1
        %s367 = smul.addr %s364, 2
        %s368 = sadd.s32 %s366, %s367
        %s369 = smul.addr %s368, 4
        %s370 = scalar_lea.vmem %s5, %s369
        %v371 = vld [vmem:[%s294] sm:$0xff]
        %v372 = vld [vmem:[%s294 + $0x8] sm:$0xff]
        %v373 = vld [vmem:[%s294 + $0x10] sm:$0xff]
        %v374 = vld [vmem:[%s294 + $0x18] sm:$0xff]
        %v375 = vld [vmem:[%s1] sm:$0xff]
        %v376 = vld [vmem:[%s2] sm:$0xff]
        %378 = vset.pattern.permute.xlu0 0
        %379 = vperm.xlu0 %378, %v376
        %v380 = vpop.permute.xlu0 %379
        %vm382 = vcmask 261120
        %v384 = vsel %vm382, %v375, 0
        %386 = vmatpush.msra.mxu0 0.0
        %387 = vmatpush.msra.mxu0 0.0
        %388 = vmatpush.msra.mxu0 0.0
        %389 = vmatpush.msra.mxu0 0.0
        %390 = vmatpush.msra.mxu0 0.0
        %391 = vmatpush.msra.mxu0 0.0
        %392 = vmatpush.msra.mxu0 0.0
        %393 = vmatpush.msra.mxu0 0.0
        %394 = vmatpush.msra.mxu0 0.0
        %395 = vmatpush.msra.mxu0 0.0
        %396 = vmatpush.msra.mxu0 0.0
        %397 = vmatpush.msra.mxu0 0.0
        %398 = vmatpush.msra.mxu0 %v374
        %399 = vmatpush.msra.mxu0 %v373
        %400 = vmatpush.msra.mxu0 %v372
        %401 = vmatpush.msra.mxu0 %v371
        %402 = vmatmul.f32.gmra.mxu0 %v384
        %v403 = vpop.f32.mrf.mxu0
        %v404 = vadd.f32 %v380, %v403
        %405 = vdwg.mxu0
        %v406 = vxor.u32 %v404, 2147483648
        %v407 = vmul.f32 %v406, 1.442695
        %v408 = vpow.pop %v407
        %v409 = vadd.f32 %v408, 1.0
        %v410 = vrcp.pop %v409
        %v411 = vmul.f32 %v409, %v410
        %v412 = vsub.f32 1.0, %v411
        %v413 = vmul.f32 %v410, %v412
        %v414 = vadd.f32 %v410, %v413
        %vm415 = vweird.f32 %v409
        %vm416 = vweird.f32 %v410
        %vm417 = vmor %vm415, %vm416
        %v418 = vsel %vm417, %v410, %v414
        %v419 = vand.u32 2147483647, %v409
        %vm420 = vcmp.eq.f32.partialorder %v419, 8.507059e+37
        %v421 = vand.u32 %v409, 2147483648
        %v422 = vor.u32 1.1754944e-38, %v421
        %v423 = vsel %vm420, %v422, %v418
        %v424 = vmul.f32 1.0, %v423
        %v425 = vrot.slane %v424, 4
        %v426 = vadd.f32 %v424, %v425
        %v427 = vrot.slane %v426, 2
        %v428 = vadd.f32 %v426, %v427
        %v429 = vrot.slane %v428, 1
        %v430 = vadd.f32 %v428, %v429
        %v431 = vmul.f32 %v430, 0.125
        %v432 = vld [vmem:[%s354] sm:$0x7]
        %v433 = vld [vmem:[%s362] sm:$0x7]
        %v434 = vsub.f32 %v433, %v432
        %v435 = vmul.f32 %v431, %v434
        %v436 = vadd.f32 %v432, %v435
        %437 = vst [vmem:[%s370] sm:$0x7] %v436
        %438 = vst [vmem:[%s346] sm:$0x1] %v431
        %p439 = scmp.lt.s32.totalorder %s28, 1
        %s440 = scalar_select %p439, %s28, 1
        %p441 = scmp.lt.s32.totalorder %s29, 1
        %s442 = scalar_select %p441, %s29, 1
        %s443 = smul.addr %s440, 2
        %s444 = sadd.s32 %s442, %s443
        %s445 = smul.addr %s444, 4
        %s446 = scalar_lea.vmem %s5, %s445
        %s447 = sand.u32 %s200, 1
        %s448 = scalar_lea.sflag [#allocation4], %s447
        %s449 = sand.u32 %s200, 1
        %s450 = scalar_lea.vmem [#allocation5], %s449
        // Predicated region
        $region45: #{tpu_custom_call.1} parent=39 // pred_check
          %p451 = pneg %p182
        $region46: #{tpu_custom_call.1} parent=39 // pred_check_branch
          %453 = sbr.rel (%p451) target = $region48
        $region47: #{tpu_custom_call.1} parent=39 // pred_region
          _
        $region48: #{tpu_custom_call.1} parent=39 // pred_fallthru
          _
        // Predicated region
        $region49: #{tpu_custom_call.1} parent=39 // pred_check
          %p454 = pneg %p210
        $region50: #{tpu_custom_call.1} parent=39 // pred_check_branch
          %456 = sbr.rel (%p454) target = $region52
        $region51: #{tpu_custom_call.1} parent=39 // pred_region
          %458 = vsyncadd %s448, 0
          %s459 = smul.addr %s28, 2
          %s460 = sadd.s32 %s29, %s459
          %s461 = scalar_lea.hbm %s6, %s460
          %s463 = sshll.u32 %s450, 4
          %s464 = int_to_ptr.vmem [resolvable:$true] %s463
          %s465 = sshll.u32 %s461, 4
          %s466 = int_to_ptr.hbm [resolvable:$true] %s465
          %468 = dma.vmem_to_hbm [thread:$0]  %s464, 16, %s466, %s448
        $region52: #{tpu_custom_call.1} parent=39 // pred_fallthru
          _
      $region40: #{tpu_custom_call.1} parent=5 // pred_fallthru
        _
      %p469 = scmp.le.s32.totalorder 2, %s19
      // Predicated region
      $region53: #{tpu_custom_call.1} parent=5 // pred_check
        %p470 = pneg %p469
      $region54: #{tpu_custom_call.1} parent=5 // pred_check_branch
        %472 = sbr.rel (%p470) target = $region56
      $region55: #{tpu_custom_call.1} parent=5 // pred_region
        %s473 = ssub.s32 %s19, 2
        // Predicated region
        $region57: #{tpu_custom_call.1} parent=55 // pred_check
          %p474 = pneg %p188
        $region58: #{tpu_custom_call.1} parent=55 // pred_check_branch
          %476 = sbr.rel (%p474) target = $region60
        $region59: #{tpu_custom_call.1} parent=55 // pred_region
          %p477 = scmp.lt.s32.totalorder %s30, 1
          %s478 = scalar_select %p477, %s30, 1
          %p479 = scmp.lt.s32.totalorder %s31, 1
          %s480 = scalar_select %p479, %s31, 1
          %s481 = smul.addr %s478, 2
          %s482 = sadd.s32 %s480, %s481
          %s483 = smul.addr %s482, 4
          %s484 = scalar_lea.vmem %s5, %s483
        $region60: #{tpu_custom_call.1} parent=55 // pred_fallthru
          _
        // Predicated region
        $region61: #{tpu_custom_call.1} parent=55 // pred_check
          %p485 = pneg %p216
        $region62: #{tpu_custom_call.1} parent=55 // pred_check_branch
          %487 = sbr.rel (%p485) target = $region64
        $region63: #{tpu_custom_call.1} parent=55 // pred_region
          %s488 = sand.u32 %s201, 1
          %s489 = scalar_lea.sflag [#allocation4], %s488
          %s490 = sand.u32 %s201, 1
          %s491 = scalar_lea.vmem [#allocation5], %s490
          %493 = dma.done %s489, 16
        $region64: #{tpu_custom_call.1} parent=55 // pred_fallthru
          _
      $region56: #{tpu_custom_call.1} parent=5 // pred_fallthru
        _
    $region6: #{tpu_custom_call.1} parent=1 // loop_footer
      %s23 = sadd.s32 1, %s19
    $region7: #{tpu_custom_call.1} parent=1 // loop_footer_branch
      %18 = sbr.rel target = $region3
    $region8: #{tpu_custom_call.1} parent=1 // loop_exit
      _
    %494 = vsyncpa [#allocation3], 1
    %s495 = scalar_lea.sflag [#allocation3], 1
    %496 = vsyncpa %s495, 1
    %497 = vsyncpa [#allocation4], 1
    %s498 = scalar_lea.sflag [#allocation4], 1
    %499 = vsyncpa %s498, 1

</llo_original>
